<compile_context>
chip_gen: v7x
topology: tpu7x:2x2x1
jax: 0.10.0
libtpu: 0.0.40
codegen_flags: <defaults>
</compile_context>

<pallas_src>
import jax
import jax.numpy as jnp
from jax.experimental import pallas as pl
from jax.experimental.pallas import tpu as pltpu

LN_EPS = 1e-5
_MAX_TB = 512   # review: TB=128 left 30-40% of wall time in per-step overhead


def _round_up(x, m):
    return ((x + m - 1) // m) * m


def _default_tb(H, in_itemsize):
    # shape-aware batch tile: keep (double-buffered streamed IO + f32 intermediates)
    # around <= 40 MiB so the kernel fits comfortably in v7x's 64 MiB VMEM.
    budget = 40 * 1024 * 1024
    per_row = 2 * 2 * H * in_itemsize + 8 * H * 4
    tb = (budget // max(per_row, 1)) // 8 * 8
    return int(max(64, min(_MAX_TB, tb)))


def _fused_kernel(emb_ref, part1_ref,
                  w_ffn_ref, ln_ref,
                  w_fc1_ref, w_fc2_ref,
                  out_ref):
    # ---- part2 path: Linear(H,H) -> LayerNorm -> Tanh -> Dropout(identity) ----
    # bf16 LHS/RHS on the MXU with f32 accumulation; LayerNorm/tanh stay f32
    # (v5e has no bf16 VPU/EUP). If the input already arrives bf16 the cast is a no-op.
    x = emb_ref[...]
    if x.dtype != jnp.bfloat16:
        x = x.astype(jnp.bfloat16)
    h = jnp.dot(x, w_ffn_ref[...], preferred_element_type=jnp.float32)
    h = h + ln_ref[0:1, :]                       # b_ffn

    mean = jnp.mean(h, axis=-1, keepdims=True)
    centered = h - mean
    var = jnp.mean(centered * centered, axis=-1, keepdims=True)
    h_norm = centered * jax.lax.rsqrt(var + LN_EPS)
    h_norm = h_norm * ln_ref[1:2, :] + ln_ref[2:3, :]   # gamma, beta
    act = jnp.tanh(h_norm)
    # TODO(synk): stochastic dropout via pltpu.prng_* if training semantics are ever needed.

    # ---- fc heads: two tiny bf16 matmuls, single lane-combined (TB, 4) store ----
    p1 = part1_ref[...]
    if p1.dtype != jnp.bfloat16:
        p1 = p1.astype(jnp.bfloat16)
    o1 = jnp.dot(p1, w_fc1_ref[...], preferred_element_type=jnp.float32)             # (TB, 2)
    o2 = jnp.dot(act.astype(jnp.bfloat16), w_fc2_ref[...],
                 preferred_element_type=jnp.float32)                                 # (TB, 2)
    out_ref[...] = jnp.concatenate([o1, o2], axis=-1)                                # (TB, 4)


def model_forward(emb, part1_out, params, ranges=(0.0, 1.0), tb=None):
    """Returns (logits_part1, logits_part2, alpha)."""
    B, H = emb.shape

    w_ffn = params["w_ffn"].astype(jnp.bfloat16)          # (H, H), [in, out]
    # packed resident per-channel params: row0 = b_ffn, row1 = gamma, row2 = beta
    ln_pack = jnp.stack([params["b_ffn"].reshape(H).astype(jnp.float32),
                         params["ln_gamma"].reshape(H).astype(jnp.float32),
                         params["ln_beta"].reshape(H).astype(jnp.float32)], axis=0)  # (3, H)
    w_fc1 = params["w_fc1"].astype(jnp.bfloat16)           # (H, 2)
    w_fc2 = params["w_fc2"].astype(jnp.bfloat16)           # (H, 2)

    in_isz = max(emb.dtype.itemsize, part1_out.dtype.itemsize)
    if tb is None:
        tb = _default_tb(H, in_isz)

    # keep the grid >= 2 steps whenever B allows it (v7x: shard across both TCs);
    # TB stays a multiple of 8, batch padded to a multiple of TB so every block is full.
    half_b = _round_up(max(1, -(-B // 2)), 8)
    TB = max(8, min(tb, half_b))
    B_pad = _round_up(B, TB)
    if B_pad != B:
        emb = jnp.pad(emb, ((0, B_pad - B), (0, 0)))
        part1_out = jnp.pad(part1_out, ((0, B_pad - B), (0, 0)))
    grid = (B_pad // TB,)

    emb_isz = emb.dtype.itemsize
    p1_isz = part1_out.dtype.itemsize

    # VMEM budget (no double counting): double-buffered streamed tiles + resident
    # weights + f32 intermediates + headroom, capped by the chip's VMEM.
    tile_io = 2 * (TB * H * emb_isz + TB * H * p1_isz + TB * 4 * 4)
    resident = H * H * 2 + 3 * H * 4 + 2 * (H * 2 * 2)
    intermediates = 8 * TB * H * 4
    need = tile_io + resident + intermediates + (4 << 20)
    try:
        cap = int(getattr(pltpu.get_tpu_info(), "vmem_capacity_bytes", 64 << 20))
    except Exception:
        cap = 64 << 20
    vmem_limit = int(min(max(need, 16 << 20), min(cap, 100 << 20)))

    cost = pl.CostEstimate(
        flops=2 * B_pad * H * H + 2 * (2 * B_pad * H * 2),
        transcendentals=B_pad * H + B_pad,
        bytes_accessed=B_pad * H * (emb_isz + p1_isz)
                       + H * H * 2 + 3 * H * 4 + 2 * H * 2 * 2 + B_pad * 4 * 4,
    )

    combined = pl.pallas_call(
        _fused_kernel,
        out_shape=jax.ShapeDtypeStruct((B_pad, 4), jnp.float32),
        grid=grid,
        in_specs=[
            pl.BlockSpec((TB, H), lambda i: (i, 0)),     # emb tile (streamed)
            pl.BlockSpec((TB, H), lambda i: (i, 0)),     # part1 (BERT pooled) tile (streamed)
            pl.BlockSpec((H, H), lambda i: (0, 0)),      # w_ffn (resident, bf16)
            pl.BlockSpec((3, H), lambda i: (0, 0)),      # packed [b_ffn; gamma; beta] (resident)
            pl.BlockSpec((H, 2), lambda i: (0, 0)),      # w_fc1 (resident, bf16)
            pl.BlockSpec((H, 2), lambda i: (0, 0)),      # w_fc2 (resident, bf16)
        ],
        out_specs=pl.BlockSpec((TB, 4), lambda i: (i, 0)),   # combined logits tile
        compiler_params=pltpu.CompilerParams(
            dimension_semantics=("parallel",),
            vmem_limit_bytes=vmem_limit,
        ),
        cost_estimate=cost,
    )(emb, part1_out, w_ffn, ln_pack, w_fc1, w_fc2)

    logits1 = combined[:B, 0:2]
    logits2 = combined[:B, 2:4]

    r0, r1 = ranges
    alpha = r0 + (r1 - r0) * (jnp.tanh(params["unconstrained_alpha"]) + 1.0) / 2.0
    return logits1, logits2, alpha


def init_params(key, hidden_dim):
    ks = jax.random.split(key, 4)
    scale = 1.0 / jnp.sqrt(hidden_dim)
    return {
        # weights stored bf16 in HBM (MXU-rate matmuls, half the weight DMA bytes)
        "w_ffn": jax.random.uniform(ks[0], (hidden_dim, hidden_dim),
                                    jnp.float32, -scale, scale).astype(jnp.bfloat16),
        "b_ffn": jax.random.uniform(ks[1], (1, hidden_dim),
                                    jnp.float32, -scale, scale),
        "ln_gamma": jnp.ones((1, hidden_dim), jnp.float32),
        "ln_beta": jnp.zeros((1, hidden_dim), jnp.float32),
        "w_fc1": jax.random.uniform(ks[2], (hidden_dim, 2),
                                    jnp.float32, -scale, scale).astype(jnp.bfloat16),
        "w_fc2": jax.random.uniform(ks[3], (hidden_dim, 2),
                                    jnp.float32, -scale, scale).astype(jnp.bfloat16),
        "unconstrained_alpha": jnp.float32(0.0),
    }


if __name__ == "__main__":
    B, H = 8, 32  # small shapes: batch=8, hidden_dim=32
    key = jax.random.PRNGKey(0)
    k_emb, k_p1, k_params = jax.random.split(key, 3)

    emb = jax.random.normal(k_emb, (B, H), jnp.float32)        # word embeddings
    part1_out = jax.random.normal(k_p1, (B, H), jnp.float32)   # stand-in for BERT pooled output
    params = init_params(k_params, H)

    logits1, logits2, alpha = model_forward(emb, part1_out, params, ranges=(0.0, 1.0))
    jax.block_until_ready((logits1, logits2, alpha))

    # lightweight correctness check against a pure-JAX reference
    # (operands rounded to bf16 exactly as the kernel feeds the MXU)
    w_ffn_f32 = params["w_ffn"].astype(jnp.float32)
    emb_bf = emb.astype(jnp.bfloat16).astype(jnp.float32)
    p1_bf = part1_out.astype(jnp.bfloat16).astype(jnp.float32)
    w_fc1_f32 = params["w_fc1"].astype(jnp.float32)
    w_fc2_f32 = params["w_fc2"].astype(jnp.float32)

    h_ref = emb_bf @ w_ffn_f32 + params["b_ffn"]
    mu = h_ref.mean(-1, keepdims=True)
    var = ((h_ref - mu) ** 2).mean(-1, keepdims=True)
    hn = (h_ref - mu) / jnp.sqrt(var + LN_EPS) * params["ln_gamma"] + params["ln_beta"]
    act_ref = jnp.tanh(hn).astype(jnp.bfloat16).astype(jnp.float32)
    ref2 = act_ref @ w_fc2_f32
    ref1 = p1_bf @ w_fc1_f32

    assert jnp.allclose(logits2, ref2, atol=2e-2), "part2 mismatch"
    assert jnp.allclose(logits1, ref1, atol=2e-2), "part1 mismatch"
    assert jnp.allclose(alpha, 0.5), "alpha mismatch"

    print("KERNEL_OK")
</pallas_src>

<mosaic_0001>
module attributes {stable_mosaic.version = 11 : i64} {
  func.func @_fused_kernel(%arg0: i32, %arg1: memref<8x32xf32, #tpu.memory_space<vmem>>, %arg2: memref<8x32xf32, #tpu.memory_space<vmem>>, %arg3: memref<32x32xbf16, #tpu.memory_space<vmem>>, %arg4: memref<3x32xf32, #tpu.memory_space<vmem>>, %arg5: memref<32x2xbf16, #tpu.memory_space<vmem>>, %arg6: memref<32x2xbf16, #tpu.memory_space<vmem>>, %arg7: memref<8x4xf32, #tpu.memory_space<vmem>>) attributes {dimension_semantics = [#tpu.dimension_semantics<parallel>], iteration_bounds = array<i64: 1>, scalar_prefetch = 0 : i64, scratch_operands = 0 : i64, tpu.core_type = #tpu.core_type<tc>, window_params = [{transform_indices = @transform_0, window_bounds = array<i64: 8, 32>}, {transform_indices = @transform_1, window_bounds = array<i64: 8, 32>}, {pipeline_mode = #tpu.pipeline_mode<synchronous>, transform_indices = @transform_2, window_bounds = array<i64: 32, 32>}, {pipeline_mode = #tpu.pipeline_mode<synchronous>, transform_indices = @transform_3, window_bounds = array<i64: 3, 32>}, {pipeline_mode = #tpu.pipeline_mode<synchronous>, transform_indices = @transform_4, window_bounds = array<i64: 32, 2>}, {pipeline_mode = #tpu.pipeline_mode<synchronous>, transform_indices = @transform_5, window_bounds = array<i64: 32, 2>}, {transform_indices = @transform_6, window_bounds = array<i64: 8, 4>}]} {
    %c0 = arith.constant 0 : index
    %c0_0 = arith.constant 0 : index
    %0 = vector.load %arg1[%c0, %c0_0] : memref<8x32xf32, #tpu.memory_space<vmem>>, vector<8x32xf32>
    %1 = arith.truncf %0 : vector<8x32xf32> to vector<8x32xbf16>
    %c0_1 = arith.constant 0 : index
    %c0_2 = arith.constant 0 : index
    %2 = vector.load %arg3[%c0_1, %c0_2] : memref<32x32xbf16, #tpu.memory_space<vmem>>, vector<32x32xbf16>
    %cst = arith.constant dense<0.000000e+00> : vector<8x32xf32>
    %3 = tpu.matmul %1, %2, %cst {dimension_numbers = #tpu.dot_dimension_numbers<[1], [0], [0], [1], [0, 0, 1, 1], [], []>} : vector<8x32xbf16>, vector<32x32xbf16>, vector<8x32xf32> -> vector<8x32xf32>
    %c0_3 = arith.constant 0 : index
    %c0_4 = arith.constant 0 : index
    %4 = vector.load %arg4[%c0_3, %c0_4] : memref<3x32xf32, #tpu.memory_space<vmem>>, vector<1x32xf32>
    %5 = vector.broadcast %4 : vector<1x32xf32> to vector<8x32xf32>
    %6 = arith.addf %3, %5 : vector<8x32xf32>
    %cst_5 = arith.constant dense<0.000000e+00> : vector<8xf32>
    %7 = vector.multi_reduction <add>, %6, %cst_5 [1] : vector<8x32xf32> to vector<8xf32>
    %8 = vector.shape_cast %7 : vector<8xf32> to vector<8x1xf32>
    %cst_6 = arith.constant 3.200000e+01 : f32
    %9 = vector.broadcast %cst_6 : f32 to vector<8x1xf32>
    %10 = arith.divf %8, %9 : vector<8x1xf32>
    %11 = vector.broadcast %10 : vector<8x1xf32> to vector<8x32xf32>
    %12 = arith.subf %6, %11 : vector<8x32xf32>
    %13 = arith.mulf %12, %12 : vector<8x32xf32>
    %cst_7 = arith.constant dense<0.000000e+00> : vector<8xf32>
    %14 = vector.multi_reduction <add>, %13, %cst_7 [1] : vector<8x32xf32> to vector<8xf32>
    %15 = vector.shape_cast %14 : vector<8xf32> to vector<8x1xf32>
    %cst_8 = arith.constant 3.200000e+01 : f32
    %16 = vector.broadcast %cst_8 : f32 to vector<8x1xf32>
    %17 = arith.divf %15, %16 : vector<8x1xf32>
    %cst_9 = arith.constant 9.99999974E-6 : f32
    %18 = vector.broadcast %cst_9 : f32 to vector<8x1xf32>
    %19 = arith.addf %17, %18 : vector<8x1xf32>
    %20 = math.rsqrt %19 : vector<8x1xf32>
    %21 = vector.broadcast %20 : vector<8x1xf32> to vector<8x32xf32>
    %22 = arith.mulf %12, %21 : vector<8x32xf32>
    %c1 = arith.constant 1 : index
    %c0_10 = arith.constant 0 : index
    %23 = vector.load %arg4[%c1, %c0_10] : memref<3x32xf32, #tpu.memory_space<vmem>>, vector<1x32xf32>
    %24 = vector.broadcast %23 : vector<1x32xf32> to vector<8x32xf32>
    %25 = arith.mulf %22, %24 : vector<8x32xf32>
    %c2 = arith.constant 2 : index
    %c0_11 = arith.constant 0 : index
    %26 = vector.load %arg4[%c2, %c0_11] : memref<3x32xf32, #tpu.memory_space<vmem>>, vector<1x32xf32>
    %27 = vector.broadcast %26 : vector<1x32xf32> to vector<8x32xf32>
    %28 = arith.addf %25, %27 : vector<8x32xf32>
    %29 = math.tanh %28 : vector<8x32xf32>
    %c0_12 = arith.constant 0 : index
    %c0_13 = arith.constant 0 : index
    %30 = vector.load %arg2[%c0_12, %c0_13] : memref<8x32xf32, #tpu.memory_space<vmem>>, vector<8x32xf32>
    %31 = arith.truncf %30 : vector<8x32xf32> to vector<8x32xbf16>
    %c0_14 = arith.constant 0 : index
    %c0_15 = arith.constant 0 : index
    %32 = vector.load %arg5[%c0_14, %c0_15] : memref<32x2xbf16, #tpu.memory_space<vmem>>, vector<32x2xbf16>
    %cst_16 = arith.constant dense<0.000000e+00> : vector<8x2xf32>
    %33 = tpu.matmul %31, %32, %cst_16 {dimension_numbers = #tpu.dot_dimension_numbers<[1], [0], [0], [1], [0, 0, 1, 1], [], []>} : vector<8x32xbf16>, vector<32x2xbf16>, vector<8x2xf32> -> vector<8x2xf32>
    %34 = arith.truncf %29 : vector<8x32xf32> to vector<8x32xbf16>
    %c0_17 = arith.constant 0 : index
    %c0_18 = arith.constant 0 : index
    %35 = vector.load %arg6[%c0_17, %c0_18] : memref<32x2xbf16, #tpu.memory_space<vmem>>, vector<32x2xbf16>
    %cst_19 = arith.constant dense<0.000000e+00> : vector<8x2xf32>
    %36 = tpu.matmul %34, %35, %cst_19 {dimension_numbers = #tpu.dot_dimension_numbers<[1], [0], [0], [1], [0, 0, 1, 1], [], []>} : vector<8x32xbf16>, vector<32x2xbf16>, vector<8x2xf32> -> vector<8x2xf32>
    %37 = tpu.concatenate %33, %36 in 1 : vector<8x2xf32>, vector<8x2xf32> -> vector<8x4xf32>
    %c0_20 = arith.constant 0 : index
    %c0_21 = arith.constant 0 : index
    %38 = vector.load %arg7[%c0_20, %c0_21] : memref<8x4xf32, #tpu.memory_space<vmem>>, vector<8x4xf32>
    tpu.vector_store %arg7[%c0_20, %c0_21], %37 {strides = array<i32>} : memref<8x4xf32, #tpu.memory_space<vmem>>, vector<8x4xf32>,
    return
  }
  func.func @transform_0(%arg0: i32) -> (i32, i32) {
    %c0_i32 = arith.constant 0 : i32
    %c0_i32_0 = arith.constant 0 : i32
    return %arg0, %c0_i32 : i32, i32
  }
  func.func @transform_1(%arg0: i32) -> (i32, i32) {
    %c0_i32 = arith.constant 0 : i32
    %c0_i32_0 = arith.constant 0 : i32
    return %arg0, %c0_i32 : i32, i32
  }
  func.func @transform_2(%arg0: i32) -> (i32, i32) {
    %c0_i32 = arith.constant 0 : i32
    %c0_i32_0 = arith.constant 0 : i32
    %c0_i32_1 = arith.constant 0 : i32
    return %c0_i32, %c0_i32_0 : i32, i32
  }
  func.func @transform_3(%arg0: i32) -> (i32, i32) {
    %c0_i32 = arith.constant 0 : i32
    %c0_i32_0 = arith.constant 0 : i32
    %c0_i32_1 = arith.constant 0 : i32
    return %c0_i32, %c0_i32_0 : i32, i32
  }
  func.func @transform_4(%arg0: i32) -> (i32, i32) {
    %c0_i32 = arith.constant 0 : i32
    %c0_i32_0 = arith.constant 0 : i32
    %c0_i32_1 = arith.constant 0 : i32
    return %c0_i32, %c0_i32_0 : i32, i32
  }
  func.func @transform_5(%arg0: i32) -> (i32, i32) {
    %c0_i32 = arith.constant 0 : i32
    %c0_i32_0 = arith.constant 0 : i32
    %c0_i32_1 = arith.constant 0 : i32
    return %c0_i32, %c0_i32_0 : i32, i32
  }
  func.func @transform_6(%arg0: i32) -> (i32, i32) {
    %c0_i32 = arith.constant 0 : i32
    %c0_i32_0 = arith.constant 0 : i32
    return %arg0, %c0_i32 : i32, i32
  }
}

</mosaic_0001>

<llo_original>
// kernel: tpu_custom_call.1
$region0: #{tpu_custom_call.1}
  #allocation0 [shape = 'u32[]', space=smem, size = 0x4, offset = 0x4, fixed_abs, tag = 'smem constant byte address 0x4 - core index']
  #allocation1 [shape = 'u32[144,128]{1,0:T(1,128)}', space=vmem, size = 0x12000, scoped, tag = 'internal scratch']
  %s0 = inlined_call_operand.vmem [shape: f32[8,32], index: 0, kind: input, shape index: {}]
  %s1 = inlined_call_operand.vmem [shape: f32[8,32], index: 1, kind: input, shape index: {}]
  %s2 = inlined_call_operand.vmem [shape: bf16[32,32], index: 2, kind: input, shape index: {}]
  %s3 = inlined_call_operand.vmem [shape: f32[3,32], index: 3, kind: input, shape index: {}]
  %s4 = inlined_call_operand.vmem [shape: bf16[32,2], index: 4, kind: input, shape index: {}]
  %s5 = inlined_call_operand.vmem [shape: bf16[32,2], index: 5, kind: input, shape index: {}]
  %s6 = inlined_call_operand.vmem [shape: f32[8,4], index: 6, kind: output, shape index: {}]
  %s7 = sld [smem:[#allocation0]]
  $region34: #{tpu_custom_call.1} parent=0
    _
  %s9 = ssub.s32 1, %s7
  %s10 = scalar_select 0, %s9, %s7
  // Predicated region
  $region2: #{tpu_custom_call.1} parent=0 // pred_check
    _
  $region3: #{tpu_custom_call.1} parent=0 // pred_check_branch
    %12 = sbr.rel (0) target = $region5
  $region4: #{tpu_custom_call.1} parent=0 // pred_region
    _
  $region5: #{tpu_custom_call.1} parent=0 // pred_fallthru
    _
  // Predicated region
  $region6: #{tpu_custom_call.1} parent=0 // pred_check
    _
  $region7: #{tpu_custom_call.1} parent=0 // pred_check_branch
    %14 = sbr.rel (0) target = $region9
  $region8: #{tpu_custom_call.1} parent=0 // pred_region
    _
  $region9: #{tpu_custom_call.1} parent=0 // pred_fallthru
    _
  // Predicated region
  $region10: #{tpu_custom_call.1} parent=0 // pred_check
    _
  $region11: #{tpu_custom_call.1} parent=0 // pred_check_branch
    %16 = sbr.rel (0) target = $region13
  $region12: #{tpu_custom_call.1} parent=0 // pred_region
    _
  $region13: #{tpu_custom_call.1} parent=0 // pred_fallthru
    _
  // Predicated region
  $region14: #{tpu_custom_call.1} parent=0 // pred_check
    _
  $region15: #{tpu_custom_call.1} parent=0 // pred_check_branch
    %18 = sbr.rel (0) target = $region17
  $region16: #{tpu_custom_call.1} parent=0 // pred_region
    _
  $region17: #{tpu_custom_call.1} parent=0 // pred_fallthru
    _
  // Predicated region
  $region18: #{tpu_custom_call.1} parent=0 // pred_check
    _
  $region19: #{tpu_custom_call.1} parent=0 // pred_check_branch
    %20 = sbr.rel (0) target = $region21
  $region20: #{tpu_custom_call.1} parent=0 // pred_region
    _
  $region21: #{tpu_custom_call.1} parent=0 // pred_fallthru
    _
  // Predicated region
  $region22: #{tpu_custom_call.1} parent=0 // pred_check
    _
  $region23: #{tpu_custom_call.1} parent=0 // pred_check_branch
    %22 = sbr.rel (0) target = $region25
  $region24: #{tpu_custom_call.1} parent=0 // pred_region
    _
  $region25: #{tpu_custom_call.1} parent=0 // pred_fallthru
    _
  %v24 = vld [vmem:[%s0] sm:$0xff]
  %v25 = vpack.c.bf16 %v24, %v24
  %v26 = vld [vmem:[%s2] sm:$0xf]
  %v27 = vld [vmem:[%s2 + $0x4] sm:$0xf]
  %v28 = vld [vmem:[%s2 + $0x8] sm:$0xf]
  %v29 = vld [vmem:[%s2 + $0xc] sm:$0xf]
  %v30 = vld [vmem:[%s3] sm:$0x1]
  %v31 = vlaneseq
  %v32 = vshrl.u32 %v31, 7
  %v33 = vsub.s32 0, %v32
  %v34 = vrot.slane %v30, %v33
  %v39 = vunpack.c.l.b16 %v26
  %v40 = vunpack.c.l.b16 %v27
  %v41 = vunpack.c.l.b16 %v28
  %v42 = vunpack.c.l.b16 %v29
  %v43 = vpack.c.b16 %v40, %v39
  %v44 = vpack.c.b16 %v42, %v41
  %vm47 = vcmask 261120
  %v49 = vsel %vm47, %v25, 0
  %51 = vmatprep.subr.bf16.mxu0 0
  %52 = vmatpush1.bf16.msra.mxu0 %v43
  %53 = vmatprep.subr.bf16.mxu0 0
  %54 = vmatpush1.bf16.msra.mxu0 %v44
  %55 = vmatprep.subr.bf16.mxu0 0
  %56 = vmatpush1.bf16.msra.mxu0 0
  %57 = vmatprep.subr.bf16.mxu0 0
  %58 = vmatpush1.bf16.msra.mxu0 0
  %59 = vmatprep.subr.bf16.mxu0 0
  %60 = vmatpush1.bf16.msra.mxu0 0
  %61 = vmatprep.subr.bf16.mxu0 0
  %62 = vmatpush1.bf16.msra.mxu0 0
  %63 = vmatprep.subr.bf16.mxu0 0
  %64 = vmatpush1.bf16.msra.mxu0 0
  %65 = vmatprep.subr.bf16.mxu0 0
  %66 = vmatpush1.bf16.msra.mxu0 0
  %67 = vmatprep.subr.bf16.mxu0 0
  %68 = vmatpush1.bf16.msra.mxu0 0
  %69 = vmatprep.subr.bf16.mxu0 0
  %70 = vmatpush1.bf16.msra.mxu0 0
  %71 = vmatprep.subr.bf16.mxu0 0
  %72 = vmatpush1.bf16.msra.mxu0 0
  %73 = vmatprep.subr.bf16.mxu0 0
  %74 = vmatpush1.bf16.msra.mxu0 0
  %75 = vmatprep.subr.bf16.mxu0 0
  %76 = vmatpush1.bf16.msra.mxu0 0
  %77 = vmatprep.subr.bf16.mxu0 0
  %78 = vmatpush1.bf16.msra.mxu0 0
  %79 = vmatprep.subr.bf16.mxu0 0
  %80 = vmatpush1.bf16.msra.mxu0 0
  %81 = vmatprep.subr.bf16.mxu0 0
  %82 = vmatpush1.bf16.msra.mxu0 0
  %83 = vmatprep.mubr.bf16.mxu0 0
  %84 = vmatmul.mubr.bf16.gmra.mrb[0].mxu0 %v49
  %v85 = vpop.f32.mrb[0].mxu0
  %v86 = vadd.f32 %v34, %v85
  %v87 = vpop.f32.mrb[0].mxu0
  %v88 = vpop.f32.mrb[0].mxu0
  %v89 = vpop.f32.mrb[0].mxu0
  %90 = vdwg.mxu0
  %v91 = vsel %vm47, %v86, 0.0
  %92 = vadd.xlane.f32.xlu0 %v91
  %v93 = vpop.xlane.xlu0 %92
  %v94 = vrcp.pop 32.0
  %v95 = vmul.f32 %v93, %v94
  %v96 = vsub.f32 %v86, %v95
  %v97 = vmul.f32 %v96, %v96
  %v98 = vsel %vm47, %v97, 0.0
  %99 = vadd.xlane.f32.xlu0 %v98
  %v100 = vpop.xlane.xlu0 %99
  %v101 = vmul.f32 %v100, %v94
  %v102 = vadd.f32 %v101, 1e-05
  %v103 = vrsqrt.pop %v102
  %v104 = vmul.f32 %v96, %v103
  %v105 = vld [vmem:[%s3 + $0x1] sm:$0x1]
  %v106 = vlaneseq
  %v107 = vshrl.u32 %v106, 7
  %v108 = vsub.s32 0, %v107
  %v109 = vrot.slane %v105, %v108
  %v110 = vmul.f32 %v104, %v109
  %v111 = vld [vmem:[%s3 + $0x2] sm:$0x1]
  %v112 = vlaneseq
  %v113 = vshrl.u32 %v112, 7
  %v114 = vsub.s32 0, %v113
  %v115 = vrot.slane %v111, %v114
  %v116 = vadd.f32 %v110, %v115
  %v117 = vtanh.pop %v116
  %v118 = vld [vmem:[%s1] sm:$0xff]
  %v119 = vpack.c.bf16 %v118, %v118
  %v120 = vld [vmem:[%s4] sm:$0xf]
  %v121 = vld [vmem:[%s4 + $0x4] sm:$0xf]
  %v122 = vld [vmem:[%s4 + $0x8] sm:$0xf]
  %v123 = vld [vmem:[%s4 + $0xc] sm:$0xf]
  %v128 = vunpack.c.l.b16 %v120
  %v129 = vunpack.c.l.b16 %v121
  %v130 = vunpack.c.l.b16 %v122
  %v131 = vunpack.c.l.b16 %v123
  %v132 = vpack.c.b16 %v129, %v128
  %v133 = vpack.c.b16 %v131, %v130
  %v137 = vsel %vm47, %v119, 0
  %139 = vmatprep.subr.bf16.mxu0 0
  %140 = vmatpush1.bf16.msra.mxu0 %v132
  %141 = vmatprep.subr.bf16.mxu0 0
  %142 = vmatpush1.bf16.msra.mxu0 %v133
  %143 = vmatprep.subr.bf16.mxu0 0
  %144 = vmatpush1.bf16.msra.mxu0 0
  %145 = vmatprep.subr.bf16.mxu0 0
  %146 = vmatpush1.bf16.msra.mxu0 0
  %147 = vmatprep.subr.bf16.mxu0 0
  %148 = vmatpush1.bf16.msra.mxu0 0
  %149 = vmatprep.subr.bf16.mxu0 0
  %150 = vmatpush1.bf16.msra.mxu0 0
  %151 = vmatprep.subr.bf16.mxu0 0
  %152 = vmatpush1.bf16.msra.mxu0 0
  %153 = vmatprep.subr.bf16.mxu0 0
  %154 = vmatpush1.bf16.msra.mxu0 0
  %155 = vmatprep.subr.bf16.mxu0 0
  %156 = vmatpush1.bf16.msra.mxu0 0
  %157 = vmatprep.subr.bf16.mxu0 0
  %158 = vmatpush1.bf16.msra.mxu0 0
  %159 = vmatprep.subr.bf16.mxu0 0
  %160 = vmatpush1.bf16.msra.mxu0 0
  %161 = vmatprep.subr.bf16.mxu0 0
  %162 = vmatpush1.bf16.msra.mxu0 0
  %163 = vmatprep.subr.bf16.mxu0 0
  %164 = vmatpush1.bf16.msra.mxu0 0
  %165 = vmatprep.subr.bf16.mxu0 0
  %166 = vmatpush1.bf16.msra.mxu0 0
  %167 = vmatprep.subr.bf16.mxu0 0
  %168 = vmatpush1.bf16.msra.mxu0 0
  %169 = vmatprep.subr.bf16.mxu0 0
  %170 = vmatpush1.bf16.msra.mxu0 0
  %171 = vmatprep.mubr.bf16.mxu0 0
  %172 = vmatmul.mubr.bf16.gmra.mrb[0].mxu0 %v137
  %v173 = vpop.f32.mrb[0].mxu0
  %v174 = vadd.f32 0.0, %v173
  %v175 = vpop.f32.mrb[0].mxu0
  %v176 = vpop.f32.mrb[0].mxu0
  %v177 = vpop.f32.mrb[0].mxu0
  %178 = vdwg.mxu0
  %v179 = vpack.c.bf16 %v117, %v117
  %v180 = vld [vmem:[%s5] sm:$0xf]
  %v181 = vld [vmem:[%s5 + $0x4] sm:$0xf]
  %v182 = vld [vmem:[%s5 + $0x8] sm:$0xf]
  %v183 = vld [vmem:[%s5 + $0xc] sm:$0xf]
  %v188 = vunpack.c.l.b16 %v180
  %v189 = vunpack.c.l.b16 %v181
  %v190 = vunpack.c.l.b16 %v182
  %v191 = vunpack.c.l.b16 %v183
  %v192 = vpack.c.b16 %v189, %v188
  %v193 = vpack.c.b16 %v191, %v190
  %v197 = vsel %vm47, %v179, 0
  %199 = vmatprep.subr.bf16.mxu0 0
  %200 = vmatpush1.bf16.msra.mxu0 %v192
  %201 = vmatprep.subr.bf16.mxu0 0
  %202 = vmatpush1.bf16.msra.mxu0 %v193
  %203 = vmatprep.subr.bf16.mxu0 0
  %204 = vmatpush1.bf16.msra.mxu0 0
  %205 = vmatprep.subr.bf16.mxu0 0
  %206 = vmatpush1.bf16.msra.mxu0 0
  %207 = vmatprep.subr.bf16.mxu0 0
  %208 = vmatpush1.bf16.msra.mxu0 0
  %209 = vmatprep.subr.bf16.mxu0 0
  %210 = vmatpush1.bf16.msra.mxu0 0
  %211 = vmatprep.subr.bf16.mxu0 0
  %212 = vmatpush1.bf16.msra.mxu0 0
  %213 = vmatprep.subr.bf16.mxu0 0
  %214 = vmatpush1.bf16.msra.mxu0 0
  %215 = vmatprep.subr.bf16.mxu0 0
  %216 = vmatpush1.bf16.msra.mxu0 0
  %217 = vmatprep.subr.bf16.mxu0 0
  %218 = vmatpush1.bf16.msra.mxu0 0
  %219 = vmatprep.subr.bf16.mxu0 0
  %220 = vmatpush1.bf16.msra.mxu0 0
  %221 = vmatprep.subr.bf16.mxu0 0
  %222 = vmatpush1.bf16.msra.mxu0 0
  %223 = vmatprep.subr.bf16.mxu0 0
  %224 = vmatpush1.bf16.msra.mxu0 0
  %225 = vmatprep.subr.bf16.mxu0 0
  %226 = vmatpush1.bf16.msra.mxu0 0
  %227 = vmatprep.subr.bf16.mxu0 0
  %228 = vmatpush1.bf16.msra.mxu0 0
  %229 = vmatprep.subr.bf16.mxu0 0
  %230 = vmatpush1.bf16.msra.mxu0 0
  %231 = vmatprep.mubr.bf16.mxu0 0
  %232 = vmatmul.mubr.bf16.gmra.mrb[0].mxu0 %v197
  %v233 = vpop.f32.mrb[0].mxu0
  %v234 = vadd.f32 0.0, %v233
  %v235 = vpop.f32.mrb[0].mxu0
  %v236 = vpop.f32.mrb[0].mxu0
  %v237 = vpop.f32.mrb[0].mxu0
  %238 = vdwg.mxu0
  %240 = vrot.lane.b32.xlu0 %v234, 2
  %v241 = vpop.permute.xlu0 %240
  %vm243 = vcmask 15360
  %v244 = vsel %vm243, %v174, %v241
  %vm245 = vcmask 31744
  %246 = vst.msk [vmem:[%s6] sm:$0xff] %vm245, %v244
  // Predicated region
  $region26: #{tpu_custom_call.1} parent=0 // pred_check
    _
  $region27: #{tpu_custom_call.1} parent=0 // pred_check_branch
    %248 = sbr.rel (0) target = $region29
  $region28: #{tpu_custom_call.1} parent=0 // pred_region
    _
  $region29: #{tpu_custom_call.1} parent=0 // pred_fallthru
    _
  // Predicated region
  $region30: #{tpu_custom_call.1} parent=0 // pred_check
    _
  $region31: #{tpu_custom_call.1} parent=0 // pred_check_branch
    %250 = sbr.rel (0) target = $region33
  $region32: #{tpu_custom_call.1} parent=0 // pred_region
    _
  $region33: #{tpu_custom_call.1} parent=0 // pred_fallthru
    _

</llo_original>
